<compile_context>
chip_gen: v7x
topology: tpu7x:2x2x1
jax: 0.10.0
libtpu: 0.0.40
codegen_flags: <defaults>
</compile_context>

<pallas_src>
import functools

import jax
import jax.numpy as jnp
import numpy as np
from jax.experimental import pallas as pl
from jax.experimental.pallas import tpu as pltpu


# ----------------------------- Pallas kernel -------------------------------
def _decode_kernel(z_ref, w_in_ref, b_in_ref, w_f_ref, b_f_ref,
                   mu_ref, sigma_ref, *, out_dim, out_pad):
    z = z_ref[...]                                     # (C, T_tile), time on lanes
    # dec_in + ReLU
    h = jnp.dot(w_in_ref[...], z, preferred_element_type=jnp.float32) + b_in_ref[...]
    h = jnp.maximum(h, 0.0)                            # (hidden, T_tile)
    # folded dec_hidden chain + both output heads in ONE matmul
    o = jnp.dot(w_f_ref[...], h, preferred_element_type=jnp.float32) + b_f_ref[...]
    mu = o[:out_dim, :]                                # head 0 (sublane-aligned at 0)
    ls = o[out_pad:out_pad + out_dim, :]               # head 1 (sublane-aligned at out_pad)
    # 0.1 + 0.9 * softplus(log_sigma), numerically stable softplus
    sp = jnp.maximum(ls, 0.0) + jnp.log1p(jnp.exp(-jnp.abs(ls)))
    mu_ref[...] = mu.astype(mu_ref.dtype)
    sigma_ref[...] = (0.1 + 0.9 * sp).astype(sigma_ref.dtype)


def _decode_pallas(z3, w_in, b_in, w_fused, b_fused, *, out_dim, out_pad,
                   t_tile_max=512):
    """z3: [N, C, t] (N = b*num_m).  Returns mu, sigma: [N, out_dim, t]."""
    n, c, t = z3.shape
    hidden = w_in.shape[0]
    two_out_pad = w_fused.shape[0]
    # full time dim if small, otherwise a multiple-of-128 tile (edge block masked by Pallas)
    t_tile = t if t <= t_tile_max else t_tile_max
    grid = (n, pl.cdiv(t, t_tile))

    flops = 2 * n * t * (c * hidden + hidden * two_out_pad)
    transcendentals = 2 * n * t * out_dim
    bytes_accessed = 4 * (n * c * t + 2 * n * out_dim * t
                          + w_in.size + b_in.size + w_fused.size + b_fused.size)

    kernel = functools.partial(_decode_kernel, out_dim=out_dim, out_pad=out_pad)
    mu, sigma = pl.pallas_call(
        kernel,
        out_shape=(jax.ShapeDtypeStruct((n, out_dim, t), jnp.float32),
                   jax.ShapeDtypeStruct((n, out_dim, t), jnp.float32)),
        grid_spec=pltpu.PrefetchScalarGridSpec(
            num_scalar_prefetch=0,
            grid=grid,
            in_specs=[
                pl.BlockSpec((None, c, t_tile), lambda i, j: (i, 0, j)),   # z slab
                pl.BlockSpec((hidden, c), lambda i, j: (0, 0)),            # dec_in.weight
                pl.BlockSpec((hidden, 1), lambda i, j: (0, 0)),            # dec_in.bias
                pl.BlockSpec((two_out_pad, hidden), lambda i, j: (0, 0)),  # fused chain W
                pl.BlockSpec((two_out_pad, 1), lambda i, j: (0, 0)),       # fused chain b
            ],
            out_specs=[
                pl.BlockSpec((None, out_dim, t_tile), lambda i, j: (i, 0, j)),
                pl.BlockSpec((None, out_dim, t_tile), lambda i, j: (i, 0, j)),
            ],
        ),
        compiler_params=pltpu.CompilerParams(
            dimension_semantics=("parallel", "parallel")),
        cost_estimate=pl.CostEstimate(flops=flops,
                                      transcendentals=transcendentals,
                                      bytes_accessed=bytes_accessed),
    )(z3, w_in, b_in, w_fused, b_fused)
    return mu, sigma


# --------------------------- weight-chain folding ---------------------------
def _fold_decoder_params(params):
    """Fold dec_hidden (no activations) and both dec_out heads into one matrix/bias.

    Column convention (NCL): y = W_fused @ h + b_fused, h = relu(W_in @ z + b_in).
    Valid because there is no nonlinearity between dec_hidden layers and dec_out.
    """
    hidden = params["w_in"].shape[0]
    out_dim = params["w_o1"].shape[0]
    out_pad = ((out_dim + 7) // 8) * 8                 # sublane-align each head
    m = jnp.eye(hidden, dtype=jnp.float32)
    v = jnp.zeros((hidden,), dtype=jnp.float32)
    for i in range(params["w_h"].shape[0]):            # static Python loop
        m = params["w_h"][i] @ m
        v = params["w_h"][i] @ v + params["b_h"][i]

    def head(w, b):
        wf = jnp.pad(w @ m, ((0, out_pad - out_dim), (0, 0)))
        bf = jnp.pad(w @ v + b, (0, out_pad - out_dim))
        return wf, bf

    w_mu, b_mu = head(params["w_o1"], params["b_o1"])
    w_ls, b_ls = head(params["w_o2"], params["b_o2"])
    w_fused = jnp.concatenate([w_mu, w_ls], axis=0)           # [2*out_pad, hidden]
    b_fused = jnp.concatenate([b_mu, b_ls], axis=0)[:, None]  # [2*out_pad, 1]
    return w_fused, b_fused, out_dim, out_pad


# ------------------------------ JAX wrapper ---------------------------------
def observation_model_forward(z_list, diffusion_emb, params, *, t_tile_max=512):
    """Mirrors ObservationModel.forward. Returns (mu, sigma) as [b, num_m, out_dim, t]."""
    z = jnp.concatenate(z_list, axis=2)                       # [b, num_m, C, t]
    b, num_m, c, t = z.shape
    if diffusion_emb is not None:
        emb = diffusion_emb[:, 0, :, 0]                       # squeeze(1).squeeze(-1) -> [b, 128]
        emb = emb @ params["w_dp1"].T + params["b_dp1"]       # Linear(128, hidden)
        emb = emb @ params["w_dp2"].T + params["b_dp2"]       # Linear(hidden, input_dim)
        z = z + emb[:, None, :, None]                         # broadcast over num_m, t

    w_fused, b_fused, out_dim, out_pad = _fold_decoder_params(params)
    z3 = z.reshape(b * num_m, c, t)                           # free reshape (no transpose)
    mu3, sigma3 = _decode_pallas(
        z3, params["w_in"], params["b_in"][:, None], w_fused, b_fused,
        out_dim=out_dim, out_pad=out_pad, t_tile_max=t_tile_max)
    return (mu3.reshape(b, num_m, out_dim, t),                # free reshapes
            sigma3.reshape(b, num_m, out_dim, t))


# --------------------------- deterministic params ---------------------------
def init_params(key, input_dim, output_dim, hidden_dim, num_hidden_layers,
                diffusion_embedding_dim=128):
    keys = jax.random.split(key, 12)

    def w(k, shape, fan_in):
        return jax.random.normal(k, shape, jnp.float32) / jnp.sqrt(float(fan_in))

    # Conv1d(in, out, 1): weight stored as [out, in] (kernel dim squeezed), bias [out].
    return {
        "w_in": w(keys[0], (hidden_dim, input_dim), input_dim),
        "b_in": w(keys[1], (hidden_dim,), input_dim),
        "w_h":  w(keys[2], (num_hidden_layers, hidden_dim, hidden_dim), hidden_dim),
        "b_h":  w(keys[3], (num_hidden_layers, hidden_dim), hidden_dim),
        "w_o1": w(keys[4], (output_dim, hidden_dim), hidden_dim),
        "b_o1": w(keys[5], (output_dim,), hidden_dim),
        "w_o2": w(keys[6], (output_dim, hidden_dim), hidden_dim),
        "b_o2": w(keys[7], (output_dim,), hidden_dim),
        # diffusion_projection: Linear weights stored PyTorch-style [out, in]
        "w_dp1": w(keys[8], (hidden_dim, diffusion_embedding_dim), diffusion_embedding_dim),
        "b_dp1": w(keys[9], (hidden_dim,), diffusion_embedding_dim),
        "w_dp2": w(keys[10], (input_dim, hidden_dim), hidden_dim),
        "b_dp2": w(keys[11], (input_dim,), hidden_dim),
    }


# --------------------------- pure-JAX reference -----------------------------
def reference_forward(z_list, diffusion_emb, params):
    z = jnp.concatenate(z_list, axis=2)
    if diffusion_emb is not None:
        emb = diffusion_emb[:, 0, :, 0]
        emb = emb @ params["w_dp1"].T + params["b_dp1"]
        emb = emb @ params["w_dp2"].T + params["b_dp2"]
        z = z + emb[:, None, :, None]
    b, num_m, c, t = z.shape
    zz = z.reshape(b * num_m, c, t)
    conv = lambda x, w, bb: jnp.einsum("oc,nct->not", w, x) + bb[None, :, None]
    h = jax.nn.relu(conv(zz, params["w_in"], params["b_in"]))
    for i in range(params["w_h"].shape[0]):
        h = conv(h, params["w_h"][i], params["b_h"][i])
    mu = conv(h, params["w_o1"], params["b_o1"])
    ls = conv(h, params["w_o2"], params["b_o2"])
    out_dim = params["w_o1"].shape[0]
    mu = mu.reshape(b, num_m, out_dim, t)
    sigma = 0.1 + 0.9 * jax.nn.softplus(ls.reshape(b, num_m, out_dim, t))
    return mu, sigma


# ---------------------------------- main ------------------------------------
if __name__ == "__main__":
    b, num_m, t = 2, 2, 16
    c1, c2 = 4, 4                       # z is a list; channels concat along dim=2
    input_dim = c1 + c2
    output_dim = 6
    hidden_dim = 32
    num_hidden_layers = 2

    key = jax.random.PRNGKey(0)
    k1, k2, k3, kp = jax.random.split(key, 4)
    z1 = jax.random.normal(k1, (b, num_m, c1, t), jnp.float32)
    z2 = jax.random.normal(k2, (b, num_m, c2, t), jnp.float32)
    diffusion_emb = jax.random.normal(k3, (b, 1, 128, 1), jnp.float32)

    params = init_params(kp, input_dim, output_dim, hidden_dim, num_hidden_layers)

    fwd = jax.jit(observation_model_forward, static_argnames=("t_tile_max",))

    # with diffusion embedding
    mu, sigma = fwd([z1, z2], diffusion_emb, params)
    jax.block_until_ready((mu, sigma))
    mu_ref, sigma_ref = reference_forward([z1, z2], diffusion_emb, params)
    assert mu.shape == (b, num_m, output_dim, t)
    assert sigma.shape == (b, num_m, output_dim, t)
    np.testing.assert_allclose(np.asarray(mu), np.asarray(mu_ref), rtol=2e-3, atol=2e-3)
    np.testing.assert_allclose(np.asarray(sigma), np.asarray(sigma_ref), rtol=2e-3, atol=2e-3)

    # also exercise the diffusion_emb=None path of forward()
    mu2, sigma2 = fwd([z1, z2], None, params)
    jax.block_until_ready((mu2, sigma2))
    mu2_ref, sigma2_ref = reference_forward([z1, z2], None, params)
    np.testing.assert_allclose(np.asarray(mu2), np.asarray(mu2_ref), rtol=2e-3, atol=2e-3)
    np.testing.assert_allclose(np.asarray(sigma2), np.asarray(sigma2_ref), rtol=2e-3, atol=2e-3)

    print("KERNEL_OK")
</pallas_src>

<mosaic_0001>
module attributes {stable_mosaic.version = 11 : i64} {
  func.func @_decode_kernel(%arg0: i32, %arg1: i32, %arg2: memref<1x8x16xf32, #tpu.memory_space<vmem>>, %arg3: memref<32x8xf32, #tpu.memory_space<vmem>>, %arg4: memref<32x1xf32, #tpu.memory_space<vmem>>, %arg5: memref<16x32xf32, #tpu.memory_space<vmem>>, %arg6: memref<16x1xf32, #tpu.memory_space<vmem>>, %arg7: memref<1x6x16xf32, #tpu.memory_space<vmem>>, %arg8: memref<1x6x16xf32, #tpu.memory_space<vmem>>) attributes {dimension_semantics = [#tpu.dimension_semantics<parallel>, #tpu.dimension_semantics<parallel>], iteration_bounds = array<i64: 4, 1>, scalar_prefetch = 0 : i64, scratch_operands = 0 : i64, tpu.core_type = #tpu.core_type<tc>, window_params = [{transform_indices = @transform_0, window_bounds = array<i64: 1, 8, 16>}, {pipeline_mode = #tpu.pipeline_mode<synchronous>, transform_indices = @transform_1, window_bounds = array<i64: 32, 8>}, {pipeline_mode = #tpu.pipeline_mode<synchronous>, transform_indices = @transform_2, window_bounds = array<i64: 32, 1>}, {pipeline_mode = #tpu.pipeline_mode<synchronous>, transform_indices = @transform_3, window_bounds = array<i64: 16, 32>}, {pipeline_mode = #tpu.pipeline_mode<synchronous>, transform_indices = @transform_4, window_bounds = array<i64: 16, 1>}, {transform_indices = @transform_5, window_bounds = array<i64: 1, 6, 16>}, {transform_indices = @transform_6, window_bounds = array<i64: 1, 6, 16>}]} {
    %c0 = arith.constant 0 : index
    %c0_0 = arith.constant 0 : index
    %c0_1 = arith.constant 0 : index
    %0 = vector.load %arg2[%c0, %c0_0, %c0_1] : memref<1x8x16xf32, #tpu.memory_space<vmem>>, vector<1x8x16xf32>
    %1 = vector.shape_cast %0 : vector<1x8x16xf32> to vector<8x16xf32>
    %c0_2 = arith.constant 0 : index
    %c0_3 = arith.constant 0 : index
    %2 = vector.load %arg3[%c0_2, %c0_3] : memref<32x8xf32, #tpu.memory_space<vmem>>, vector<32x8xf32>
    %cst = arith.constant dense<0.000000e+00> : vector<32x16xf32>
    %3 = tpu.matmul %2, %1, %cst {dimension_numbers = #tpu.dot_dimension_numbers<[1], [0], [0], [1], [0, 0, 1, 1], [], []>} : vector<32x8xf32>, vector<8x16xf32>, vector<32x16xf32> -> vector<32x16xf32>
    %c0_4 = arith.constant 0 : index
    %c0_5 = arith.constant 0 : index
    %4 = vector.load %arg4[%c0_4, %c0_5] : memref<32x1xf32, #tpu.memory_space<vmem>>, vector<32x1xf32>
    %5 = vector.broadcast %4 : vector<32x1xf32> to vector<32x16xf32>
    %6 = arith.addf %3, %5 : vector<32x16xf32>
    %cst_6 = arith.constant 0.000000e+00 : f32
    %7 = vector.broadcast %cst_6 : f32 to vector<32x16xf32>
    %8 = arith.maximumf %6, %7 : vector<32x16xf32>
    %c0_7 = arith.constant 0 : index
    %c0_8 = arith.constant 0 : index
    %9 = vector.load %arg5[%c0_7, %c0_8] : memref<16x32xf32, #tpu.memory_space<vmem>>, vector<16x32xf32>
    %cst_9 = arith.constant dense<0.000000e+00> : vector<16x16xf32>
    %10 = tpu.matmul %9, %8, %cst_9 {dimension_numbers = #tpu.dot_dimension_numbers<[1], [0], [0], [1], [0, 0, 1, 1], [], []>} : vector<16x32xf32>, vector<32x16xf32>, vector<16x16xf32> -> vector<16x16xf32>
    %c0_10 = arith.constant 0 : index
    %c0_11 = arith.constant 0 : index
    %11 = vector.load %arg6[%c0_10, %c0_11] : memref<16x1xf32, #tpu.memory_space<vmem>>, vector<16x1xf32>
    %12 = vector.broadcast %11 : vector<16x1xf32> to vector<16x16xf32>
    %13 = arith.addf %10, %12 : vector<16x16xf32>
    %14 = vector.extract_strided_slice %13 {offsets = [0, 0], sizes = [6, 16], strides = [1, 1]} : vector<16x16xf32> to vector<6x16xf32>
    %15 = vector.extract_strided_slice %13 {offsets = [8, 0], sizes = [6, 16], strides = [1, 1]} : vector<16x16xf32> to vector<6x16xf32>
    %cst_12 = arith.constant 0.000000e+00 : f32
    %16 = vector.broadcast %cst_12 : f32 to vector<6x16xf32>
    %17 = arith.maximumf %15, %16 : vector<6x16xf32>
    %18 = math.absf %15 : vector<6x16xf32>
    %cst_13 = arith.constant 0.000000e+00 : f32
    %19 = vector.broadcast %cst_13 : f32 to vector<6x16xf32>
    %20 = arith.subf %19, %18 : vector<6x16xf32>
    %21 = math.exp %20 : vector<6x16xf32>
    %22 = math.log1p %21 : vector<6x16xf32>
    %23 = arith.addf %17, %22 : vector<6x16xf32>
    %c0_14 = arith.constant 0 : index
    %c0_15 = arith.constant 0 : index
    %c0_16 = arith.constant 0 : index
    %24 = vector.load %arg7[%c0_14, %c0_15, %c0_16] : memref<1x6x16xf32, #tpu.memory_space<vmem>>, vector<1x6x16xf32>
    %25 = vector.shape_cast %24 : vector<1x6x16xf32> to vector<6x16xf32>
    %26 = vector.shape_cast %14 : vector<6x16xf32> to vector<1x6x16xf32>
    tpu.vector_store %arg7[%c0_14, %c0_15, %c0_16], %26 {strides = array<i32>} : memref<1x6x16xf32, #tpu.memory_space<vmem>>, vector<1x6x16xf32>,
    %cst_17 = arith.constant 0.899999976 : f32
    %27 = vector.broadcast %cst_17 : f32 to vector<6x16xf32>
    %28 = arith.mulf %27, %23 : vector<6x16xf32>
    %cst_18 = arith.constant 1.000000e-01 : f32
    %29 = vector.broadcast %cst_18 : f32 to vector<6x16xf32>
    %30 = arith.addf %29, %28 : vector<6x16xf32>
    %c0_19 = arith.constant 0 : index
    %c0_20 = arith.constant 0 : index
    %c0_21 = arith.constant 0 : index
    %31 = vector.load %arg8[%c0_19, %c0_20, %c0_21] : memref<1x6x16xf32, #tpu.memory_space<vmem>>, vector<1x6x16xf32>
    %32 = vector.shape_cast %31 : vector<1x6x16xf32> to vector<6x16xf32>
    %33 = vector.shape_cast %30 : vector<6x16xf32> to vector<1x6x16xf32>
    tpu.vector_store %arg8[%c0_19, %c0_20, %c0_21], %33 {strides = array<i32>} : memref<1x6x16xf32, #tpu.memory_space<vmem>>, vector<1x6x16xf32>,
    return
  }
  func.func @transform_0(%arg0: i32, %arg1: i32) -> (i32, i32, i32) {
    %c0_i32 = arith.constant 0 : i32
    %c0_i32_0 = arith.constant 0 : i32
    return %arg0, %c0_i32, %arg1 : i32, i32, i32
  }
  func.func @transform_1(%arg0: i32, %arg1: i32) -> (i32, i32) {
    %c0_i32 = arith.constant 0 : i32
    %c0_i32_0 = arith.constant 0 : i32
    %c0_i32_1 = arith.constant 0 : i32
    return %c0_i32, %c0_i32_0 : i32, i32
  }
  func.func @transform_2(%arg0: i32, %arg1: i32) -> (i32, i32) {
    %c0_i32 = arith.constant 0 : i32
    %c0_i32_0 = arith.constant 0 : i32
    %c0_i32_1 = arith.constant 0 : i32
    return %c0_i32, %c0_i32_0 : i32, i32
  }
  func.func @transform_3(%arg0: i32, %arg1: i32) -> (i32, i32) {
    %c0_i32 = arith.constant 0 : i32
    %c0_i32_0 = arith.constant 0 : i32
    %c0_i32_1 = arith.constant 0 : i32
    return %c0_i32, %c0_i32_0 : i32, i32
  }
  func.func @transform_4(%arg0: i32, %arg1: i32) -> (i32, i32) {
    %c0_i32 = arith.constant 0 : i32
    %c0_i32_0 = arith.constant 0 : i32
    %c0_i32_1 = arith.constant 0 : i32
    return %c0_i32, %c0_i32_0 : i32, i32
  }
  func.func @transform_5(%arg0: i32, %arg1: i32) -> (i32, i32, i32) {
    %c0_i32 = arith.constant 0 : i32
    %c0_i32_0 = arith.constant 0 : i32
    return %arg0, %c0_i32, %arg1 : i32, i32, i32
  }
  func.func @transform_6(%arg0: i32, %arg1: i32) -> (i32, i32, i32) {
    %c0_i32 = arith.constant 0 : i32
    %c0_i32_0 = arith.constant 0 : i32
    return %arg0, %c0_i32, %arg1 : i32, i32, i32
  }
}

</mosaic_0001>

<llo_original>
// kernel: observation_model_forward.1
$region0: #{observation_model_forward.1}
  #allocation0 [shape = 'u32[]', space=smem, size = 0x4, offset = 0x4, fixed_abs, tag = 'smem constant byte address 0x4 - core index']
  #allocation1 [shape = 'u32[144,128]{1,0:T(1,128)}', space=vmem, size = 0x12000, scoped, tag = 'internal scratch']
  %s0 = inlined_call_operand.vmem [shape: f32[4,8,16], index: 0, kind: input, shape index: {}]
  %s1 = inlined_call_operand.vmem [shape: f32[32,8], index: 1, kind: input, shape index: {}]
  %s2 = inlined_call_operand.vmem [shape: f32[32,1], index: 2, kind: input, shape index: {}]
  %s3 = inlined_call_operand.vmem [shape: f32[16,32], index: 3, kind: input, shape index: {}]
  %s4 = inlined_call_operand.vmem [shape: f32[16,1], index: 4, kind: input, shape index: {}]
  %s5 = inlined_call_operand.vmem [shape: f32[4,6,16], index: 5, kind: output, shape index: {0}]
  %s6 = inlined_call_operand.vmem [shape: f32[4,6,16], index: 6, kind: output, shape index: {1}]
  %7 = xla_tuple %s5, %s6
  %s8 = sld [smem:[#allocation0]]
  $region61: #{observation_model_forward.1} parent=0
    _
  %s10 = ssub.s32 1, %s8
  %s11 = scalar_select 0, %s10, %s8
  loop: start=0, step=1, limit=6
  $region2: #{observation_model_forward.1} parent=0 // loop_pre_header
    _
  $region3: #{observation_model_forward.1} parent=0 // loop_header
    %s13 = sphi 0, %s17
    %p14 = scmp.ge.s32.totalorder %s13, 6
    %s20 = sphi 0, %s32
    %s21 = sphi 0, %s28
    %s22 = sphi 0, %s20
    %s23 = sphi 0, %s21
    %s24 = sphi 0, %s22
    %s25 = sphi 0, %s23
    %s37 = sphi 0, %s39
    %s40 = sphi 0, %s37
    %s41 = sphi 0, %s40
    %s57 = sphi 0, %s41
    %s61 = sphi 0, %s61
    %s63 = sphi 0, %s61
    %s64 = sphi 0, %s63
    %s78 = sphi 0, %s64
    %s82 = sphi 0, %s82
    %s84 = sphi 0, %s82
    %s85 = sphi 0, %s84
    %s99 = sphi 0, %s85
    %s103 = sphi 0, %s103
    %s105 = sphi 0, %s103
    %s106 = sphi 0, %s105
    %s120 = sphi 0, %s106
    %s124 = sphi 0, %s124
    %s126 = sphi 0, %s124
    %s127 = sphi 0, %s126
    %s141 = sphi 0, %s127
    %s149 = sphi 0, %s151
    %s152 = sphi 0, %s149
    %s153 = sphi 0, %s152
    %s169 = sphi 0, %s153
    %s177 = sphi 0, %s179
    %s180 = sphi 0, %s177
    %s181 = sphi 0, %s180
    %s197 = sphi 0, %s181
  $region4: #{observation_model_forward.1} parent=0 // loop_header_branch
    %16 = sbr.rel (%p14) target = $region8
  $region5: #{observation_model_forward.1} parent=0 // loop_body
    %s18 = ssub.s32 %s13, 1
    %s19 = ssub.s32 %s13, 2
    %s26 = sadd.s32 1, %s21
    %p27 = scmp.ge.s32.totalorder %s26, 1
    %s28 = scalar_select %p27, 0, %s26
    %s29 = sadd.s32 1, %s20
    %s30 = scalar_select %p27, %s29, %s20
    %p31 = scmp.ge.s32.totalorder %s30, 4
    %s32 = scalar_select %p31, 0, %s30
    %s33 = ssub.s32 %s20, %s32
    %s34 = ssub.s32 %s21, %s28
    %s35 = sor.u32 %s33, %s34
    %p36 = scmp.eq.s32.totalorder %s35, 0
    %s38 = sadd.s32 %s37, 1
    %s39 = scalar_select %p36, %s37, %s38
    %p42 = pneg %p36
    %p43 = scmp.eq.s32.totalorder %s13, 3
    %p44 = por %p42, %p43
    %p45 = scmp.ne.s32.totalorder %s37, %s40
    %p46 = scmp.eq.s32.totalorder %s13, 0
    %p47 = por %p45, %p46
    %p48 = scmp.ne.s32.totalorder %s37, %s40
    %p49 = scmp.eq.s32.totalorder %s18, 3
    %p50 = por %p48, %p49
    %p51 = scmp.ne.s32.totalorder %s40, %s41
    %p52 = scmp.eq.s32.totalorder %s18, 0
    %p53 = por %p51, %p52
    %p54 = scmp.ne.s32.totalorder %s40, %s41
    %p55 = scmp.eq.s32.totalorder %s19, 3
    %p56 = por %p54, %p55
    %p58 = scmp.ne.s32.totalorder %s41, %s57
    %p59 = scmp.eq.s32.totalorder %s19, 0
    %p60 = por %p58, %p59
    %s62 = sadd.s32 %s61, 1
    %p65 = scmp.eq.s32.totalorder %s13, 3
    %p66 = scmp.ne.s32.totalorder %s61, %s63
    %p67 = scmp.eq.s32.totalorder %s13, 0
    %p68 = por %p66, %p67
    %p69 = scmp.ne.s32.totalorder %s61, %s63
    %p70 = scmp.eq.s32.totalorder %s18, 3
    %p71 = por %p69, %p70
    %p72 = scmp.ne.s32.totalorder %s63, %s64
    %p73 = scmp.eq.s32.totalorder %s18, 0
    %p74 = por %p72, %p73
    %p75 = scmp.ne.s32.totalorder %s63, %s64
    %p76 = scmp.eq.s32.totalorder %s19, 3
    %p77 = por %p75, %p76
    %p79 = scmp.ne.s32.totalorder %s64, %s78
    %p80 = scmp.eq.s32.totalorder %s19, 0
    %p81 = por %p79, %p80
    %s83 = sadd.s32 %s82, 1
    %p86 = scmp.eq.s32.totalorder %s13, 3
    %p87 = scmp.ne.s32.totalorder %s82, %s84
    %p88 = scmp.eq.s32.totalorder %s13, 0
    %p89 = por %p87, %p88
    %p90 = scmp.ne.s32.totalorder %s82, %s84
    %p91 = scmp.eq.s32.totalorder %s18, 3
    %p92 = por %p90, %p91
    %p93 = scmp.ne.s32.totalorder %s84, %s85
    %p94 = scmp.eq.s32.totalorder %s18, 0
    %p95 = por %p93, %p94
    %p96 = scmp.ne.s32.totalorder %s84, %s85
    %p97 = scmp.eq.s32.totalorder %s19, 3
    %p98 = por %p96, %p97
    %p100 = scmp.ne.s32.totalorder %s85, %s99
    %p101 = scmp.eq.s32.totalorder %s19, 0
    %p102 = por %p100, %p101
    %s104 = sadd.s32 %s103, 1
    %p107 = scmp.eq.s32.totalorder %s13, 3
    %p108 = scmp.ne.s32.totalorder %s103, %s105
    %p109 = scmp.eq.s32.totalorder %s13, 0
    %p110 = por %p108, %p109
    %p111 = scmp.ne.s32.totalorder %s103, %s105
    %p112 = scmp.eq.s32.totalorder %s18, 3
    %p113 = por %p111, %p112
    %p114 = scmp.ne.s32.totalorder %s105, %s106
    %p115 = scmp.eq.s32.totalorder %s18, 0
    %p116 = por %p114, %p115
    %p117 = scmp.ne.s32.totalorder %s105, %s106
    %p118 = scmp.eq.s32.totalorder %s19, 3
    %p119 = por %p117, %p118
    %p121 = scmp.ne.s32.totalorder %s106, %s120
    %p122 = scmp.eq.s32.totalorder %s19, 0
    %p123 = por %p121, %p122
    %s125 = sadd.s32 %s124, 1
    %p128 = scmp.eq.s32.totalorder %s13, 3
    %p129 = scmp.ne.s32.totalorder %s124, %s126
    %p130 = scmp.eq.s32.totalorder %s13, 0
    %p131 = por %p129, %p130
    %p132 = scmp.ne.s32.totalorder %s124, %s126
    %p133 = scmp.eq.s32.totalorder %s18, 3
    %p134 = por %p132, %p133
    %p135 = scmp.ne.s32.totalorder %s126, %s127
    %p136 = scmp.eq.s32.totalorder %s18, 0
    %p137 = por %p135, %p136
    %p138 = scmp.ne.s32.totalorder %s126, %s127
    %p139 = scmp.eq.s32.totalorder %s19, 3
    %p140 = por %p138, %p139
    %p142 = scmp.ne.s32.totalorder %s127, %s141
    %p143 = scmp.eq.s32.totalorder %s19, 0
    %p144 = por %p142, %p143
    %s145 = ssub.s32 %s20, %s32
    %s146 = ssub.s32 %s21, %s28
    %s147 = sor.u32 %s145, %s146
    %p148 = scmp.eq.s32.totalorder %s147, 0
    %s150 = sadd.s32 %s149, 1
    %s151 = scalar_select %p148, %s149, %s150
    %p154 = pneg %p148
    %p155 = scmp.eq.s32.totalorder %s13, 3
    %p156 = por %p154, %p155
    %p157 = scmp.ne.s32.totalorder %s149, %s152
    %p158 = scmp.eq.s32.totalorder %s13, 0
    %p159 = por %p157, %p158
    %p160 = scmp.ne.s32.totalorder %s149, %s152
    %p161 = scmp.eq.s32.totalorder %s18, 3
    %p162 = por %p160, %p161
    %p163 = scmp.ne.s32.totalorder %s152, %s153
    %p164 = scmp.eq.s32.totalorder %s18, 0
    %p165 = por %p163, %p164
    %p166 = scmp.ne.s32.totalorder %s152, %s153
    %p167 = scmp.eq.s32.totalorder %s19, 3
    %p168 = por %p166, %p167
    %p170 = scmp.ne.s32.totalorder %s153, %s169
    %p171 = scmp.eq.s32.totalorder %s19, 0
    %p172 = por %p170, %p171
    %s173 = ssub.s32 %s20, %s32
    %s174 = ssub.s32 %s21, %s28
    %s175 = sor.u32 %s173, %s174
    %p176 = scmp.eq.s32.totalorder %s175, 0
    %s178 = sadd.s32 %s177, 1
    %s179 = scalar_select %p176, %s177, %s178
    %p182 = pneg %p176
    %p183 = scmp.eq.s32.totalorder %s13, 3
    %p184 = por %p182, %p183
    %p185 = scmp.ne.s32.totalorder %s177, %s180
    %p186 = scmp.eq.s32.totalorder %s13, 0
    %p187 = por %p185, %p186
    %p188 = scmp.ne.s32.totalorder %s177, %s180
    %p189 = scmp.eq.s32.totalorder %s18, 3
    %p190 = por %p188, %p189
    %p191 = scmp.ne.s32.totalorder %s180, %s181
    %p192 = scmp.eq.s32.totalorder %s18, 0
    %p193 = por %p191, %p192
    %p194 = scmp.ne.s32.totalorder %s180, %s181
    %p195 = scmp.eq.s32.totalorder %s19, 3
    %p196 = por %p194, %p195
    %p198 = scmp.ne.s32.totalorder %s181, %s197
    %p199 = scmp.eq.s32.totalorder %s19, 0
    %p200 = por %p198, %p199
    %p201 = scmp.le.s32.totalorder 1, %s13
    %p202 = scmp.lt.s32.totalorder %s13, 5
    %p203 = pnand %p201, %p202
    %p204 = pneg %p203
    // Predicated region
    $region9: #{observation_model_forward.1} parent=5 // pred_check
      _
    $region10: #{observation_model_forward.1} parent=5 // pred_check_branch
      %206 = sbr.rel (%p203) target = $region12
    $region11: #{observation_model_forward.1} parent=5 // pred_region
      %s207 = ssub.s32 %s13, 1
      // Predicated region
      $region13: #{observation_model_forward.1} parent=11 // pred_check
        %p208 = pneg %p74
      $region14: #{observation_model_forward.1} parent=11 // pred_check_branch
        %210 = sbr.rel (%p208) target = $region16
      $region15: #{observation_model_forward.1} parent=11 // pred_region
        _
      $region16: #{observation_model_forward.1} parent=11 // pred_fallthru
        _
      // Predicated region
      $region17: #{observation_model_forward.1} parent=11 // pred_check
        %p211 = pneg %p95
      $region18: #{observation_model_forward.1} parent=11 // pred_check_branch
        %213 = sbr.rel (%p211) target = $region20
      $region19: #{observation_model_forward.1} parent=11 // pred_region
        _
      $region20: #{observation_model_forward.1} parent=11 // pred_fallthru
        _
      // Predicated region
      $region21: #{observation_model_forward.1} parent=11 // pred_check
        %p214 = pneg %p116
      $region22: #{observation_model_forward.1} parent=11 // pred_check_branch
        %216 = sbr.rel (%p214) target = $region24
      $region23: #{observation_model_forward.1} parent=11 // pred_region
        _
      $region24: #{observation_model_forward.1} parent=11 // pred_fallthru
        _
      // Predicated region
      $region25: #{observation_model_forward.1} parent=11 // pred_check
        %p217 = pneg %p137
      $region26: #{observation_model_forward.1} parent=11 // pred_check_branch
        %219 = sbr.rel (%p217) target = $region28
      $region27: #{observation_model_forward.1} parent=11 // pred_region
        _
      $region28: #{observation_model_forward.1} parent=11 // pred_fallthru
        _
    $region12: #{observation_model_forward.1} parent=5 // pred_fallthru
      _
    %p220 = scmp.lt.s32.totalorder %s13, 4
    // Predicated region
    $region29: #{observation_model_forward.1} parent=5 // pred_check
      %p221 = pneg %p220
    $region30: #{observation_model_forward.1} parent=5 // pred_check_branch
      %223 = sbr.rel (%p221) target = $region32
    $region31: #{observation_model_forward.1} parent=5 // pred_region
      // Predicated region
      $region33: #{observation_model_forward.1} parent=31 // pred_check
        %p224 = pneg %p47
      $region34: #{observation_model_forward.1} parent=31 // pred_check_branch
        %226 = sbr.rel (%p224) target = $region36
      $region35: #{observation_model_forward.1} parent=31 // pred_region
        %p227 = scmp.lt.s32.totalorder %s20, 3
        %s228 = scalar_select %p227, %s20, 3
        %p229 = scmp.lt.s32.totalorder %s21, 0
        %s230 = scalar_select %p229, %s21, 0
        %s231 = sadd.s32 %s230, %s228
        %s232 = smul.addr %s231, 8
        %s233 = scalar_lea.vmem %s0, %s232
      $region36: #{observation_model_forward.1} parent=31 // pred_fallthru
        _
    $region32: #{observation_model_forward.1} parent=5 // pred_fallthru
      _
    %p234 = scmp.le.s32.totalorder 1, %s13
    %p235 = scmp.lt.s32.totalorder %s13, 5
    %p236 = pnand %p234, %p235
    %p237 = pneg %p236
    // Predicated region
    $region37: #{observation_model_forward.1} parent=5 // pred_check
      _
    $region38: #{observation_model_forward.1} parent=5 // pred_check_branch
      %239 = sbr.rel (%p236) target = $region40
    $region39: #{observation_model_forward.1} parent=5 // pred_region
      %s240 = ssub.s32 %s13, 1
      %p241 = scmp.lt.s32.totalorder %s22, 3
      %s242 = scalar_select %p241, %s22, 3
      %p243 = scmp.lt.s32.totalorder %s23, 0
      %s244 = scalar_select %p243, %s23, 0
      %s245 = sadd.s32 %s244, %s242
      %s246 = smul.addr %s245, 8
      %s247 = scalar_lea.vmem %s0, %s246
      %p248 = pneg %p53
      %p249 = pneg %p50
      %p250 = pneg %p74
      %p251 = pneg %p71
      %p252 = pneg %p95
      %p253 = pneg %p92
      %p254 = pneg %p116
      %p255 = pneg %p113
      %p256 = pneg %p137
      %p257 = pneg %p134
      %p258 = pneg %p165
      %p259 = pneg %p162
      %p260 = scmp.lt.s32.totalorder %s22, 3
      %s261 = scalar_select %p260, %s22, 3
      %p262 = scmp.lt.s32.totalorder %s23, 0
      %s263 = scalar_select %p262, %s23, 0
      %s264 = sadd.s32 %s263, %s261
      %s265 = smul.addr %s264, 8
      %s266 = scalar_lea.vmem %s5, %s265
      %p267 = pneg %p193
      %p268 = pneg %p190
      %p269 = scmp.lt.s32.totalorder %s22, 3
      %s270 = scalar_select %p269, %s22, 3
      %p271 = scmp.lt.s32.totalorder %s23, 0
      %s272 = scalar_select %p271, %s23, 0
      %s273 = sadd.s32 %s272, %s270
      %s274 = smul.addr %s273, 8
      %s275 = scalar_lea.vmem %s6, %s274
      %p276 = scmp.lt.s32.totalorder %s22, 3
      %s277 = scalar_select %p276, %s22, 3
      %p278 = scmp.lt.s32.totalorder %s23, 0
      %s279 = scalar_select %p278, %s23, 0
      %s280 = sadd.s32 %s279, %s277
      %s281 = smul.addr %s280, 8
      %s282 = scalar_lea.vmem %s0, %s281
      %p283 = scmp.lt.s32.totalorder %s22, 3
      %s284 = scalar_select %p283, %s22, 3
      %p285 = scmp.lt.s32.totalorder %s23, 0
      %s286 = scalar_select %p285, %s23, 0
      %s287 = sadd.s32 %s286, %s284
      %s288 = smul.addr %s287, 8
      %s289 = scalar_lea.vmem %s5, %s288
      %p290 = scmp.lt.s32.totalorder %s22, 3
      %s291 = scalar_select %p290, %s22, 3
      %p292 = scmp.lt.s32.totalorder %s23, 0
      %s293 = scalar_select %p292, %s23, 0
      %s294 = sadd.s32 %s293, %s291
      %s295 = smul.addr %s294, 8
      %s296 = scalar_lea.vmem %s6, %s295
      %v297 = vld [vmem:[%s282] sm:$0xff]
      %v298 = vld [vmem:[%s1] sm:$0xff]
      %v299 = vld [vmem:[%s1 + $0x8] sm:$0xff]
      %v300 = vld [vmem:[%s1 + $0x10] sm:$0xff]
      %v301 = vld [vmem:[%s1 + $0x18] sm:$0xff]
      %v302 = vld [vmem:[%s2] sm:$0xff]
      %v303 = vld [vmem:[%s2 + $0x8] sm:$0xff]
      %v304 = vld [vmem:[%s2 + $0x10] sm:$0xff]
      %v305 = vld [vmem:[%s2 + $0x18] sm:$0xff]
      %307 = vset.pattern.permute.xlu0 0
      %308 = vperm.xlu0 %307, %v302
      %v309 = vpop.permute.xlu0 %308
      %312 = vset.pattern.permute.xlu0 0
      %313 = vperm.xlu0 %312, %v303
      %v314 = vpop.permute.xlu0 %313
      %317 = vset.pattern.permute.xlu0 0
      %318 = vperm.xlu0 %317, %v304
      %v319 = vpop.permute.xlu0 %318
      %322 = vset.pattern.permute.xlu0 0
      %323 = vperm.xlu0 %322, %v305
      %v324 = vpop.permute.xlu0 %323
      %vm326 = vcmask 64512
      %v328 = vsel %vm326, %v298, 0
      %v331 = vsel %vm326, %v299, 0
      %v334 = vsel %vm326, %v300, 0
      %v337 = vsel %vm326, %v301, 0
      %339 = vmatprep.subr.mxu0 0.0
      %340 = vmatpush1.msra.mxu0 %v297
      %341 = vmatprep.subr.mxu0 0.0
      %342 = vmatpush1.msra.mxu0 0.0
      %343 = vmatprep.subr.mxu0 0.0
      %344 = vmatpush1.msra.mxu0 0.0
      %345 = vmatprep.subr.mxu0 0.0
      %346 = vmatpush1.msra.mxu0 0.0
      %347 = vmatprep.subr.mxu0 0.0
      %348 = vmatpush1.msra.mxu0 0.0
      %349 = vmatprep.subr.mxu0 0.0
      %350 = vmatpush1.msra.mxu0 0.0
      %351 = vmatprep.subr.mxu0 0.0
      %352 = vmatpush1.msra.mxu0 0.0
      %353 = vmatprep.subr.mxu0 0.0
      %354 = vmatpush1.msra.mxu0 0.0
      %355 = vmatprep.subr.mxu0 0.0
      %356 = vmatpush1.msra.mxu0 0.0
      %357 = vmatprep.subr.mxu0 0.0
      %358 = vmatpush1.msra.mxu0 0.0
      %359 = vmatprep.subr.mxu0 0.0
      %360 = vmatpush1.msra.mxu0 0.0
      %361 = vmatprep.subr.mxu0 0.0
      %362 = vmatpush1.msra.mxu0 0.0
      %363 = vmatprep.subr.mxu0 0.0
      %364 = vmatpush1.msra.mxu0 0.0
      %365 = vmatprep.subr.mxu0 0.0
      %366 = vmatpush1.msra.mxu0 0.0
      %367 = vmatprep.subr.mxu0 0.0
      %368 = vmatpush1.msra.mxu0 0.0
      %369 = vmatprep.subr.mxu0 0.0
      %370 = vmatpush1.msra.mxu0 0.0
      %371 = vmatprep.subr.mxu0 0.0
      %372 = vmatpush1.msra.mxu0 0.0
      %373 = vmatprep.subr.mxu0 0.0
      %374 = vmatpush1.msra.mxu0 0.0
      %375 = vmatprep.subr.mxu0 0.0
      %376 = vmatpush1.msra.mxu0 0.0
      %377 = vmatprep.subr.mxu0 0.0
      %378 = vmatpush1.msra.mxu0 0.0
      %379 = vmatprep.subr.mxu0 0.0
      %380 = vmatpush1.msra.mxu0 0.0
      %381 = vmatprep.subr.mxu0 0.0
      %382 = vmatpush1.msra.mxu0 0.0
      %383 = vmatprep.subr.mxu0 0.0
      %384 = vmatpush1.msra.mxu0 0.0
      %385 = vmatprep.subr.mxu0 0.0
      %386 = vmatpush1.msra.mxu0 0.0
      %387 = vmatprep.subr.mxu0 0.0
      %388 = vmatpush1.msra.mxu0 0.0
      %389 = vmatprep.subr.mxu0 0.0
      %390 = vmatpush1.msra.mxu0 0.0
      %391 = vmatprep.subr.mxu0 0.0
      %392 = vmatpush1.msra.mxu0 0.0
      %393 = vmatprep.subr.mxu0 0.0
      %394 = vmatpush1.msra.mxu0 0.0
      %395 = vmatprep.subr.mxu0 0.0
      %396 = vmatpush1.msra.mxu0 0.0
      %397 = vmatprep.subr.mxu0 0.0
      %398 = vmatpush1.msra.mxu0 0.0
      %399 = vmatprep.subr.mxu0 0.0
      %400 = vmatpush1.msra.mxu0 0.0
      %401 = vmatprep.subr.mxu0 0.0
      %402 = vmatpush1.msra.mxu0 0.0
      %403 = vmatprep.mubr.f32.mxu0 0.0
      %404 = vmatmul.mubr.f32.gmra.mrb[0].mxu0 %v328
      %v405 = vpop.f32.mrb[0].mxu0
      %v406 = vadd.f32 %v309, %v405
      %v407 = vpop.f32.mrb[0].mxu0
      %408 = vmatprep.mubr.f32.mxu0 0.0
      %409 = vmatmul.mubr.f32.gmra.mrb[0].mxu0 %v331
      %v410 = vpop.f32.mrb[0].mxu0
      %v411 = vadd.f32 %v314, %v410
      %v412 = vpop.f32.mrb[0].mxu0
      %413 = vmatprep.mubr.f32.mxu0 0.0
      %414 = vmatmul.mubr.f32.gmra.mrb[0].mxu0 %v334
      %v415 = vpop.f32.mrb[0].mxu0
      %v416 = vadd.f32 %v319, %v415
      %v417 = vpop.f32.mrb[0].mxu0
      %418 = vmatprep.mubr.f32.mxu0 0.0
      %419 = vmatmul.mubr.f32.gmra.mrb[0].mxu0 %v337
      %v420 = vpop.f32.mrb[0].mxu0
      %v421 = vadd.f32 %v324, %v420
      %v422 = vpop.f32.mrb[0].mxu0
      %423 = vdwg.mxu0
      %v424 = vmax.f32 %v406, 0.0
      %v425 = vmax.f32 %v411, 0.0
      %v426 = vmax.f32 %v416, 0.0
      %v427 = vmax.f32 %v421, 0.0
      %v428 = vld [vmem:[%s3] sm:$0xff]
      %v429 = vld [vmem:[%s3 + $0x8] sm:$0xff]
      %v430 = vld [vmem:[%s4] sm:$0xff]
      %v431 = vld [vmem:[%s4 + $0x8] sm:$0xff]
      %433 = vset.pattern.permute.xlu0 0
      %434 = vperm.xlu0 %433, %v430
      %v435 = vpop.permute.xlu0 %434
      %438 = vset.pattern.permute.xlu0 0
      %439 = vperm.xlu0 %438, %v431
      %v440 = vpop.permute.xlu0 %439
      %vm442 = vcmask 261120
      %v444 = vsel %vm442, %v428, 0
      %v447 = vsel %vm442, %v429, 0
      %449 = vmatprep.subr.mxu0 0.0
      %450 = vmatpush1.msra.mxu0 %v424
      %451 = vmatprep.subr.mxu0 0.0
      %452 = vmatpush1.msra.mxu0 %v425
      %453 = vmatprep.subr.mxu0 0.0
      %454 = vmatpush1.msra.mxu0 %v426
      %455 = vmatprep.subr.mxu0 0.0
      %456 = vmatpush1.msra.mxu0 %v427
      %457 = vmatprep.subr.mxu0 0.0
      %458 = vmatpush1.msra.mxu0 0.0
      %459 = vmatprep.subr.mxu0 0.0
      %460 = vmatpush1.msra.mxu0 0.0
      %461 = vmatprep.subr.mxu0 0.0
      %462 = vmatpush1.msra.mxu0 0.0
      %463 = vmatprep.subr.mxu0 0.0
      %464 = vmatpush1.msra.mxu0 0.0
      %465 = vmatprep.subr.mxu0 0.0
      %466 = vmatpush1.msra.mxu0 0.0
      %467 = vmatprep.subr.mxu0 0.0
      %468 = vmatpush1.msra.mxu0 0.0
      %469 = vmatprep.subr.mxu0 0.0
      %470 = vmatpush1.msra.mxu0 0.0
      %471 = vmatprep.subr.mxu0 0.0
      %472 = vmatpush1.msra.mxu0 0.0
      %473 = vmatprep.subr.mxu0 0.0
      %474 = vmatpush1.msra.mxu0 0.0
      %475 = vmatprep.subr.mxu0 0.0
      %476 = vmatpush1.msra.mxu0 0.0
      %477 = vmatprep.subr.mxu0 0.0
      %478 = vmatpush1.msra.mxu0 0.0
      %479 = vmatprep.subr.mxu0 0.0
      %480 = vmatpush1.msra.mxu0 0.0
      %481 = vmatprep.subr.mxu0 0.0
      %482 = vmatpush1.msra.mxu0 0.0
      %483 = vmatprep.subr.mxu0 0.0
      %484 = vmatpush1.msra.mxu0 0.0
      %485 = vmatprep.subr.mxu0 0.0
      %486 = vmatpush1.msra.mxu0 0.0
      %487 = vmatprep.subr.mxu0 0.0
      %488 = vmatpush1.msra.mxu0 0.0
      %489 = vmatprep.subr.mxu0 0.0
      %490 = vmatpush1.msra.mxu0 0.0
      %491 = vmatprep.subr.mxu0 0.0
      %492 = vmatpush1.msra.mxu0 0.0
      %493 = vmatprep.subr.mxu0 0.0
      %494 = vmatpush1.msra.mxu0 0.0
      %495 = vmatprep.subr.mxu0 0.0
      %496 = vmatpush1.msra.mxu0 0.0
      %497 = vmatprep.subr.mxu0 0.0
      %498 = vmatpush1.msra.mxu0 0.0
      %499 = vmatprep.subr.mxu0 0.0
      %500 = vmatpush1.msra.mxu0 0.0
      %501 = vmatprep.subr.mxu0 0.0
      %502 = vmatpush1.msra.mxu0 0.0
      %503 = vmatprep.subr.mxu0 0.0
      %504 = vmatpush1.msra.mxu0 0.0
      %505 = vmatprep.subr.mxu0 0.0
      %506 = vmatpush1.msra.mxu0 0.0
      %507 = vmatprep.subr.mxu0 0.0
      %508 = vmatpush1.msra.mxu0 0.0
      %509 = vmatprep.subr.mxu0 0.0
      %510 = vmatpush1.msra.mxu0 0.0
      %511 = vmatprep.subr.mxu0 0.0
      %512 = vmatpush1.msra.mxu0 0.0
      %513 = vmatprep.mubr.f32.mxu0 0.0
      %514 = vmatmul.mubr.f32.gmra.mrb[0].mxu0 %v444
      %v515 = vpop.f32.mrb[0].mxu0
      %v516 = vadd.f32 %v435, %v515
      %v517 = vpop.f32.mrb[0].mxu0
      %518 = vmatprep.mubr.f32.mxu0 0.0
      %519 = vmatmul.mubr.f32.gmra.mrb[0].mxu0 %v447
      %v520 = vpop.f32.mrb[0].mxu0
      %v521 = vadd.f32 %v440, %v520
      %v522 = vpop.f32.mrb[0].mxu0
      %523 = vdwg.mxu0
      %v524 = vmax.f32 %v521, 0.0
      %v525 = vand.u32 2147483647, %v521
      %v526 = vsub.f32 0.0, %v525
      %v527 = vmul.f32 %v526, 1.442695
      %v528 = vpow.pop %v527
      %v529 = vadd.f32 %v528, 1.0
      %v530 = vlog2.pop %v529
      %v531 = vmul.f32 %v530, 0.6931472
      %v532 = vmul.f32 -0.5, %v528
      %v533 = vadd.f32 %v532, 1.0
      %v534 = vmul.f32 %v533, %v528
      %v535 = vand.u32 2147483647, %v528
      %vm536 = vcmp.lt.f32.partialorder %v535, 0.0004427343
      %v537 = vsel %vm536, %v534, %v531
      %v538 = vadd.f32 %v524, %v537
      %vm539 = vcmask 128000
      %540 = vst.msk [vmem:[%s289] sm:$0x3f] %vm539, %v516
      %v541 = vmul.f32 %v538, 0.9
      %v542 = vadd.f32 %v541, 0.1
      %543 = vst.msk [vmem:[%s296] sm:$0x3f] %vm539, %v542
      %p544 = scmp.lt.s32.totalorder %s22, 3
      %s545 = scalar_select %p544, %s22, 3
      %p546 = scmp.lt.s32.totalorder %s23, 0
      %s547 = scalar_select %p546, %s23, 0
      %s548 = sadd.s32 %s547, %s545
      %s549 = smul.addr %s548, 8
      %s550 = scalar_lea.vmem %s5, %s549
      %p551 = scmp.lt.s32.totalorder %s22, 3
      %s552 = scalar_select %p551, %s22, 3
      %p553 = scmp.lt.s32.totalorder %s23, 0
      %s554 = scalar_select %p553, %s23, 0
      %s555 = sadd.s32 %s554, %s552
      %s556 = smul.addr %s555, 8
      %s557 = scalar_lea.vmem %s6, %s556
      // Predicated region
      $region41: #{observation_model_forward.1} parent=39 // pred_check
        %p558 = pneg %p162
      $region42: #{observation_model_forward.1} parent=39 // pred_check_branch
        %560 = sbr.rel (%p558) target = $region44
      $region43: #{observation_model_forward.1} parent=39 // pred_region
        _
      $region44: #{observation_model_forward.1} parent=39 // pred_fallthru
        _
      // Predicated region
      $region45: #{observation_model_forward.1} parent=39 // pred_check
        %p561 = pneg %p190
      $region46: #{observation_model_forward.1} parent=39 // pred_check_branch
        %563 = sbr.rel (%p561) target = $region48
      $region47: #{observation_model_forward.1} parent=39 // pred_region
        _
      $region48: #{observation_model_forward.1} parent=39 // pred_fallthru
        _
    $region40: #{observation_model_forward.1} parent=5 // pred_fallthru
      _
    %p564 = scmp.le.s32.totalorder 2, %s13
    // Predicated region
    $region49: #{observation_model_forward.1} parent=5 // pred_check
      %p565 = pneg %p564
    $region50: #{observation_model_forward.1} parent=5 // pred_check_branch
      %567 = sbr.rel (%p565) target = $region52
    $region51: #{observation_model_forward.1} parent=5 // pred_region
      %s568 = ssub.s32 %s13, 2
      // Predicated region
      $region53: #{observation_model_forward.1} parent=51 // pred_check
        %p569 = pneg %p168
      $region54: #{observation_model_forward.1} parent=51 // pred_check_branch
        %571 = sbr.rel (%p569) target = $region56
      $region55: #{observation_model_forward.1} parent=51 // pred_region
        %p572 = scmp.lt.s32.totalorder %s24, 3
        %s573 = scalar_select %p572, %s24, 3
        %p574 = scmp.lt.s32.totalorder %s25, 0
        %s575 = scalar_select %p574, %s25, 0
        %s576 = sadd.s32 %s575, %s573
        %s577 = smul.addr %s576, 8
        %s578 = scalar_lea.vmem %s5, %s577
      $region56: #{observation_model_forward.1} parent=51 // pred_fallthru
        _
      // Predicated region
      $region57: #{observation_model_forward.1} parent=51 // pred_check
        %p579 = pneg %p196
      $region58: #{observation_model_forward.1} parent=51 // pred_check_branch
        %581 = sbr.rel (%p579) target = $region60
      $region59: #{observation_model_forward.1} parent=51 // pred_region
        %p582 = scmp.lt.s32.totalorder %s24, 3
        %s583 = scalar_select %p582, %s24, 3
        %p584 = scmp.lt.s32.totalorder %s25, 0
        %s585 = scalar_select %p584, %s25, 0
        %s586 = sadd.s32 %s585, %s583
        %s587 = smul.addr %s586, 8
        %s588 = scalar_lea.vmem %s6, %s587
      $region60: #{observation_model_forward.1} parent=51 // pred_fallthru
        _
    $region52: #{observation_model_forward.1} parent=5 // pred_fallthru
      _
  $region6: #{observation_model_forward.1} parent=0 // loop_footer
    %s17 = sadd.s32 1, %s13
  $region7: #{observation_model_forward.1} parent=0 // loop_footer_branch
    %12 = sbr.rel target = $region3
  $region8: #{observation_model_forward.1} parent=0 // loop_exit
    _

</llo_original>
